<compile_context>
chip_gen: v7x
topology: tpu7x:2x2x1
jax: 0.10.0
libtpu: 0.0.40
codegen_flags: <defaults>
</compile_context>

<pallas_src>
import functools

import jax
import jax.numpy as jnp
from jax.experimental import pallas as pl
from jax.experimental.pallas import tpu as pltpu

_LANE = 128      # lane width (last dim)
_SUBLANE = 8     # f32 sublane width (second-to-last dim)


def _round_up(x, m):
    return (x + m - 1) // m * m


def _mlp_kernel(x_ref, w1_ref, b1_ref, w2_ref, b2_ref, o_ref, *, compute_dtype):
    # fc1: [TB, K] @ [K, Hp] + [1, Hp] -> ReLU   (Hp is lane-dense; padding is zero)
    x = x_ref[...].astype(compute_dtype)
    w1 = w1_ref[...].astype(compute_dtype)
    h = jnp.dot(x, w1, preferred_element_type=jnp.float32)
    h = jnp.maximum(h + b1_ref[...], 0.0)
    # fc2: [TB, Hp] @ [Hp, Ap] + [1, Ap]
    w2 = w2_ref[...].astype(compute_dtype)
    q = jnp.dot(h.astype(compute_dtype), w2, preferred_element_type=jnp.float32)
    o_ref[...] = (q + b2_ref[...]).astype(o_ref.dtype)


@functools.partial(jax.jit, static_argnames=("compute_dtype", "block_b"))
def nn_forward(state, w1, b1, w2, b2, *, compute_dtype=jnp.bfloat16, block_b=512):
    """Pallas forward pass of the 2-layer Q-network.

    state: [B, input_neurones]  f32
    w1:    [input_neurones, H]  f32   (transposed vs torch nn.Linear weight)
    b1:    [1, H]               f32
    w2:    [H, actions_output]  f32   (transposed vs torch)
    b2:    [1, actions_output]  f32
    returns q_values: [B, actions_output] f32
    """
    B, K = state.shape
    H = w1.shape[1]
    A = w2.shape[1]

    # Lane-dense padding of hidden / output feature dims (exact: zero padding).
    Hp = _round_up(max(H, _LANE), _LANE)
    Ap = _round_up(max(A, _LANE), _LANE)
    w1p = jnp.pad(w1, ((0, 0), (0, Hp - H)))
    b1p = jnp.pad(b1.reshape(1, H), ((0, 0), (0, Hp - H)))
    w2p = jnp.pad(w2, ((0, Hp - H), (0, Ap - A)))
    b2p = jnp.pad(b2.reshape(1, A), ((0, 0), (0, Ap - A)))

    # Batch tiling: largest-of {block_b, B rounded to sublane}, multiple of 8.
    TB = _round_up(min(block_b, _round_up(B, _SUBLANE)), _SUBLANE)
    Bp = _round_up(B, TB)
    state_p = jnp.pad(state, ((0, Bp - B), (0, 0)))

    grid = (Bp // TB,)
    flops = 2 * Bp * (K * Hp + Hp * Ap)
    bytes_accessed = 4 * (state_p.size + w1p.size + b1p.size + w2p.size
                          + b2p.size + Bp * Ap)

    out = pl.pallas_call(
        functools.partial(_mlp_kernel, compute_dtype=compute_dtype),
        out_shape=jax.ShapeDtypeStruct((Bp, Ap), jnp.float32),
        grid_spec=pltpu.PrefetchScalarGridSpec(
            num_scalar_prefetch=0,
            grid=grid,
            in_specs=[
                pl.BlockSpec((TB, K), lambda i: (i, 0)),   # state tile
                pl.BlockSpec((K, Hp), lambda i: (0, 0)),   # w1 (resident)
                pl.BlockSpec((1, Hp), lambda i: (0, 0)),   # b1 (resident)
                pl.BlockSpec((Hp, Ap), lambda i: (0, 0)),  # w2 (resident)
                pl.BlockSpec((1, Ap), lambda i: (0, 0)),   # b2 (resident)
            ],
            out_specs=pl.BlockSpec((TB, Ap), lambda i: (i, 0)),
        ),
        compiler_params=pltpu.CompilerParams(
            dimension_semantics=("parallel",),
        ),
        cost_estimate=pl.CostEstimate(
            flops=flops, transcendentals=0, bytes_accessed=bytes_accessed),
    )(state_p, w1p, b1p, w2p, b2p)

    # Slice padded batch rows / padded action columns back off (layout plumbing).
    return out[:B, :A]


def init_params(key, input_neurones, actions_output, hidden=30):
    """Deterministic init matching nn.Linear's default U(-1/sqrt(fan_in), +1/sqrt(fan_in))."""
    k1, k2, k3, k4 = jax.random.split(key, 4)
    bound1 = 1.0 / jnp.sqrt(jnp.float32(input_neurones))
    bound2 = 1.0 / jnp.sqrt(jnp.float32(hidden))
    w1 = jax.random.uniform(k1, (input_neurones, hidden), jnp.float32, -bound1, bound1)
    b1 = jax.random.uniform(k2, (1, hidden), jnp.float32, -bound1, bound1)
    w2 = jax.random.uniform(k3, (hidden, actions_output), jnp.float32, -bound2, bound2)
    b2 = jax.random.uniform(k4, (1, actions_output), jnp.float32, -bound2, bound2)
    return w1, b1, w2, b2


if __name__ == "__main__":
    key = jax.random.PRNGKey(0)
    k_params, k_state = jax.random.split(key)

    batch = 37                 # deliberately not a multiple of 8 (exercises padding)
    input_neurones = 32
    actions_output = 4

    w1, b1, w2, b2 = init_params(k_params, input_neurones, actions_output)
    state = jax.random.normal(k_state, (batch, input_neurones), jnp.float32)

    # --- exact f32 path (matches the PyTorch module bit-for-bit up to fp assoc.) ---
    q_f32 = nn_forward(state, w1, b1, w2, b2, compute_dtype=jnp.float32)
    jax.block_until_ready(q_f32)
    ref_f32 = jnp.maximum(state @ w1 + b1, 0.0) @ w2 + b2
    assert q_f32.shape == (batch, actions_output)
    assert jnp.allclose(q_f32, ref_f32, atol=1e-5, rtol=1e-5)

    # --- bf16 MXU fast path (default), checked against a bf16-cast reference ---
    q_bf16 = nn_forward(state, w1, b1, w2, b2)  # compute_dtype=bf16, f32 accumulation
    jax.block_until_ready(q_bf16)
    bf16 = jnp.bfloat16
    h_ref = jnp.maximum(
        jnp.dot(state.astype(bf16), w1.astype(bf16),
                preferred_element_type=jnp.float32) + b1, 0.0)
    ref_bf16 = jnp.dot(h_ref.astype(bf16), w2.astype(bf16),
                       preferred_element_type=jnp.float32) + b2
    assert q_bf16.shape == (batch, actions_output)
    assert jnp.allclose(q_bf16, ref_bf16, atol=1e-2, rtol=1e-2)

    print("KERNEL_OK")
</pallas_src>

<mosaic_0001>
module attributes {stable_mosaic.version = 11 : i64} {
  func.func @_mlp_kernel(%arg0: i32, %arg1: memref<40x32xf32, #tpu.memory_space<vmem>>, %arg2: memref<32x128xf32, #tpu.memory_space<vmem>>, %arg3: memref<1x128xf32, #tpu.memory_space<vmem>>, %arg4: memref<128x128xf32, #tpu.memory_space<vmem>>, %arg5: memref<1x128xf32, #tpu.memory_space<vmem>>, %arg6: memref<40x128xf32, #tpu.memory_space<vmem>>) attributes {dimension_semantics = [#tpu.dimension_semantics<parallel>], iteration_bounds = array<i64: 1>, scalar_prefetch = 0 : i64, scratch_operands = 0 : i64, tpu.core_type = #tpu.core_type<tc>, window_params = [{transform_indices = @transform_0, window_bounds = array<i64: 40, 32>}, {pipeline_mode = #tpu.pipeline_mode<synchronous>, transform_indices = @transform_1, window_bounds = array<i64: 32, 128>}, {pipeline_mode = #tpu.pipeline_mode<synchronous>, transform_indices = @transform_2, window_bounds = array<i64: 1, 128>}, {pipeline_mode = #tpu.pipeline_mode<synchronous>, transform_indices = @transform_3, window_bounds = array<i64: 128, 128>}, {pipeline_mode = #tpu.pipeline_mode<synchronous>, transform_indices = @transform_4, window_bounds = array<i64: 1, 128>}, {transform_indices = @transform_5, window_bounds = array<i64: 40, 128>}]} {
    %c0 = arith.constant 0 : index
    %c0_0 = arith.constant 0 : index
    %0 = vector.load %arg1[%c0, %c0_0] : memref<40x32xf32, #tpu.memory_space<vmem>>, vector<40x32xf32>
    %c0_1 = arith.constant 0 : index
    %c0_2 = arith.constant 0 : index
    %1 = vector.load %arg2[%c0_1, %c0_2] : memref<32x128xf32, #tpu.memory_space<vmem>>, vector<32x128xf32>
    %cst = arith.constant dense<0.000000e+00> : vector<40x128xf32>
    %2 = tpu.matmul %0, %1, %cst {dimension_numbers = #tpu.dot_dimension_numbers<[1], [0], [0], [1], [0, 0, 1, 1], [], []>} : vector<40x32xf32>, vector<32x128xf32>, vector<40x128xf32> -> vector<40x128xf32>
    %c0_3 = arith.constant 0 : index
    %c0_4 = arith.constant 0 : index
    %3 = vector.load %arg3[%c0_3, %c0_4] : memref<1x128xf32, #tpu.memory_space<vmem>>, vector<1x128xf32>
    %4 = vector.broadcast %3 : vector<1x128xf32> to vector<40x128xf32>
    %5 = arith.addf %2, %4 : vector<40x128xf32>
    %cst_5 = arith.constant 0.000000e+00 : f32
    %6 = vector.broadcast %cst_5 : f32 to vector<40x128xf32>
    %7 = arith.maximumf %5, %6 : vector<40x128xf32>
    %c0_6 = arith.constant 0 : index
    %c0_7 = arith.constant 0 : index
    %8 = vector.load %arg4[%c0_6, %c0_7] : memref<128x128xf32, #tpu.memory_space<vmem>>, vector<128x128xf32>
    %cst_8 = arith.constant dense<0.000000e+00> : vector<40x128xf32>
    %9 = tpu.matmul %7, %8, %cst_8 {dimension_numbers = #tpu.dot_dimension_numbers<[1], [0], [0], [1], [0, 0, 1, 1], [], []>} : vector<40x128xf32>, vector<128x128xf32>, vector<40x128xf32> -> vector<40x128xf32>
    %c0_9 = arith.constant 0 : index
    %c0_10 = arith.constant 0 : index
    %10 = vector.load %arg5[%c0_9, %c0_10] : memref<1x128xf32, #tpu.memory_space<vmem>>, vector<1x128xf32>
    %11 = vector.broadcast %10 : vector<1x128xf32> to vector<40x128xf32>
    %12 = arith.addf %9, %11 : vector<40x128xf32>
    %c0_11 = arith.constant 0 : index
    %c0_12 = arith.constant 0 : index
    %13 = vector.load %arg6[%c0_11, %c0_12] : memref<40x128xf32, #tpu.memory_space<vmem>>, vector<40x128xf32>
    tpu.vector_store %arg6[%c0_11, %c0_12], %12 {strides = array<i32>} : memref<40x128xf32, #tpu.memory_space<vmem>>, vector<40x128xf32>,
    return
  }
  func.func @transform_0(%arg0: i32) -> (i32, i32) {
    %c0_i32 = arith.constant 0 : i32
    %c0_i32_0 = arith.constant 0 : i32
    return %arg0, %c0_i32 : i32, i32
  }
  func.func @transform_1(%arg0: i32) -> (i32, i32) {
    %c0_i32 = arith.constant 0 : i32
    %c0_i32_0 = arith.constant 0 : i32
    %c0_i32_1 = arith.constant 0 : i32
    return %c0_i32, %c0_i32_0 : i32, i32
  }
  func.func @transform_2(%arg0: i32) -> (i32, i32) {
    %c0_i32 = arith.constant 0 : i32
    %c0_i32_0 = arith.constant 0 : i32
    %c0_i32_1 = arith.constant 0 : i32
    return %c0_i32, %c0_i32_0 : i32, i32
  }
  func.func @transform_3(%arg0: i32) -> (i32, i32) {
    %c0_i32 = arith.constant 0 : i32
    %c0_i32_0 = arith.constant 0 : i32
    %c0_i32_1 = arith.constant 0 : i32
    return %c0_i32, %c0_i32_0 : i32, i32
  }
  func.func @transform_4(%arg0: i32) -> (i32, i32) {
    %c0_i32 = arith.constant 0 : i32
    %c0_i32_0 = arith.constant 0 : i32
    %c0_i32_1 = arith.constant 0 : i32
    return %c0_i32, %c0_i32_0 : i32, i32
  }
  func.func @transform_5(%arg0: i32) -> (i32, i32) {
    %c0_i32 = arith.constant 0 : i32
    %c0_i32_0 = arith.constant 0 : i32
    return %arg0, %c0_i32 : i32, i32
  }
}

</mosaic_0001>

<llo_original>
// kernel: nn_forward.1
$region0: #{nn_forward.1}
  #allocation0 [shape = 'u32[]', space=smem, size = 0x4, offset = 0x4, fixed_abs, tag = 'smem constant byte address 0x4 - core index']
  #allocation1 [shape = 'u32[144,128]{1,0:T(1,128)}', space=vmem, size = 0x12000, scoped, tag = 'internal scratch']
  %s0 = inlined_call_operand.vmem [shape: f32[40,32], index: 0, kind: input, shape index: {}]
  %s1 = inlined_call_operand.vmem [shape: f32[32,128], index: 1, kind: input, shape index: {}]
  %s2 = inlined_call_operand.vmem [shape: f32[1,128], index: 2, kind: input, shape index: {}]
  %s3 = inlined_call_operand.vmem [shape: f32[128,128], index: 3, kind: input, shape index: {}]
  %s4 = inlined_call_operand.vmem [shape: f32[1,128], index: 4, kind: input, shape index: {}]
  %s5 = inlined_call_operand.vmem [shape: f32[40,128], index: 5, kind: output, shape index: {}]
  %s6 = sld [smem:[#allocation0]]
  $region30: #{nn_forward.1} parent=0
    _
  %s8 = ssub.s32 1, %s6
  %s9 = scalar_select 0, %s8, %s6
  // Predicated region
  $region2: #{nn_forward.1} parent=0 // pred_check
    _
  $region3: #{nn_forward.1} parent=0 // pred_check_branch
    %11 = sbr.rel (0) target = $region5
  $region4: #{nn_forward.1} parent=0 // pred_region
    _
  $region5: #{nn_forward.1} parent=0 // pred_fallthru
    _
  // Predicated region
  $region6: #{nn_forward.1} parent=0 // pred_check
    _
  $region7: #{nn_forward.1} parent=0 // pred_check_branch
    %13 = sbr.rel (0) target = $region9
  $region8: #{nn_forward.1} parent=0 // pred_region
    _
  $region9: #{nn_forward.1} parent=0 // pred_fallthru
    _
  // Predicated region
  $region10: #{nn_forward.1} parent=0 // pred_check
    _
  $region11: #{nn_forward.1} parent=0 // pred_check_branch
    %15 = sbr.rel (0) target = $region13
  $region12: #{nn_forward.1} parent=0 // pred_region
    _
  $region13: #{nn_forward.1} parent=0 // pred_fallthru
    _
  // Predicated region
  $region14: #{nn_forward.1} parent=0 // pred_check
    _
  $region15: #{nn_forward.1} parent=0 // pred_check_branch
    %17 = sbr.rel (0) target = $region17
  $region16: #{nn_forward.1} parent=0 // pred_region
    _
  $region17: #{nn_forward.1} parent=0 // pred_fallthru
    _
  // Predicated region
  $region18: #{nn_forward.1} parent=0 // pred_check
    _
  $region19: #{nn_forward.1} parent=0 // pred_check_branch
    %19 = sbr.rel (0) target = $region21
  $region20: #{nn_forward.1} parent=0 // pred_region
    _
  $region21: #{nn_forward.1} parent=0 // pred_fallthru
    _
  %v20 = vld [vmem:[%s0] sm:$0xff]
  %v21 = vld [vmem:[%s0 + $0x8] sm:$0xff]
  %v22 = vld [vmem:[%s0 + $0x10] sm:$0xff]
  %v23 = vld [vmem:[%s0 + $0x18] sm:$0xff]
  %v24 = vld [vmem:[%s0 + $0x20] sm:$0xff]
  %v25 = vld [vmem:[%s1] sm:$0xff]
  %v26 = vld [vmem:[%s1 + $0x8] sm:$0xff]
  %v27 = vld [vmem:[%s1 + $0x10] sm:$0xff]
  %v28 = vld [vmem:[%s1 + $0x18] sm:$0xff]
  %v29 = vld [vmem:[%s2] sm:$0x1]
  %v31 = vlaneseq
  %v32 = vshrl.u32 %v31, 7
  %v33 = vsub.s32 0, %v32
  %v34 = vrot.slane %v29, %v33
  %vm36 = vcmask 261120
  %v38 = vsel %vm36, %v20, 0
  %v41 = vsel %vm36, %v21, 0
  %v44 = vsel %vm36, %v22, 0
  %v47 = vsel %vm36, %v23, 0
  %v50 = vsel %vm36, %v24, 0
  %52 = vmatprep.subr.mxu0 0.0
  %53 = vmatpush1.msra.mxu0 %v25
  %54 = vmatprep.subr.mxu0 0.0
  %55 = vmatpush1.msra.mxu0 %v26
  %56 = vmatprep.subr.mxu0 0.0
  %57 = vmatpush1.msra.mxu0 %v27
  %58 = vmatprep.subr.mxu0 0.0
  %59 = vmatpush1.msra.mxu0 %v28
  %60 = vmatprep.subr.mxu0 0.0
  %61 = vmatpush1.msra.mxu0 0.0
  %62 = vmatprep.subr.mxu0 0.0
  %63 = vmatpush1.msra.mxu0 0.0
  %64 = vmatprep.subr.mxu0 0.0
  %65 = vmatpush1.msra.mxu0 0.0
  %66 = vmatprep.subr.mxu0 0.0
  %67 = vmatpush1.msra.mxu0 0.0
  %68 = vmatprep.subr.mxu0 0.0
  %69 = vmatpush1.msra.mxu0 0.0
  %70 = vmatprep.subr.mxu0 0.0
  %71 = vmatpush1.msra.mxu0 0.0
  %72 = vmatprep.subr.mxu0 0.0
  %73 = vmatpush1.msra.mxu0 0.0
  %74 = vmatprep.subr.mxu0 0.0
  %75 = vmatpush1.msra.mxu0 0.0
  %76 = vmatprep.subr.mxu0 0.0
  %77 = vmatpush1.msra.mxu0 0.0
  %78 = vmatprep.subr.mxu0 0.0
  %79 = vmatpush1.msra.mxu0 0.0
  %80 = vmatprep.subr.mxu0 0.0
  %81 = vmatpush1.msra.mxu0 0.0
  %82 = vmatprep.subr.mxu0 0.0
  %83 = vmatpush1.msra.mxu0 0.0
  %84 = vmatprep.subr.mxu0 0.0
  %85 = vmatpush1.msra.mxu0 0.0
  %86 = vmatprep.subr.mxu0 0.0
  %87 = vmatpush1.msra.mxu0 0.0
  %88 = vmatprep.subr.mxu0 0.0
  %89 = vmatpush1.msra.mxu0 0.0
  %90 = vmatprep.subr.mxu0 0.0
  %91 = vmatpush1.msra.mxu0 0.0
  %92 = vmatprep.subr.mxu0 0.0
  %93 = vmatpush1.msra.mxu0 0.0
  %94 = vmatprep.subr.mxu0 0.0
  %95 = vmatpush1.msra.mxu0 0.0
  %96 = vmatprep.subr.mxu0 0.0
  %97 = vmatpush1.msra.mxu0 0.0
  %98 = vmatprep.subr.mxu0 0.0
  %99 = vmatpush1.msra.mxu0 0.0
  %100 = vmatprep.subr.mxu0 0.0
  %101 = vmatpush1.msra.mxu0 0.0
  %102 = vmatprep.subr.mxu0 0.0
  %103 = vmatpush1.msra.mxu0 0.0
  %104 = vmatprep.subr.mxu0 0.0
  %105 = vmatpush1.msra.mxu0 0.0
  %106 = vmatprep.subr.mxu0 0.0
  %107 = vmatpush1.msra.mxu0 0.0
  %108 = vmatprep.subr.mxu0 0.0
  %109 = vmatpush1.msra.mxu0 0.0
  %110 = vmatprep.subr.mxu0 0.0
  %111 = vmatpush1.msra.mxu0 0.0
  %112 = vmatprep.subr.mxu0 0.0
  %113 = vmatpush1.msra.mxu0 0.0
  %114 = vmatprep.subr.mxu0 0.0
  %115 = vmatpush1.msra.mxu0 0.0
  %116 = vmatprep.mubr.f32.mxu0 0.0
  %117 = vmatmul.mubr.f32.gmra.mrb[0].mxu0 %v38
  %v118 = vpop.f32.mrb[0].mxu0
  %v119 = vadd.f32 %v34, %v118
  %v120 = vpop.f32.mrb[0].mxu0
  %121 = vmatprep.mubr.f32.mxu0 0.0
  %122 = vmatmul.mubr.f32.gmra.mrb[0].mxu0 %v41
  %v123 = vpop.f32.mrb[0].mxu0
  %v124 = vadd.f32 %v34, %v123
  %v125 = vpop.f32.mrb[0].mxu0
  %126 = vmatprep.mubr.f32.mxu0 0.0
  %127 = vmatmul.mubr.f32.gmra.mrb[0].mxu0 %v44
  %v128 = vpop.f32.mrb[0].mxu0
  %v129 = vadd.f32 %v34, %v128
  %v130 = vpop.f32.mrb[0].mxu0
  %131 = vmatprep.mubr.f32.mxu0 0.0
  %132 = vmatmul.mubr.f32.gmra.mrb[0].mxu0 %v47
  %v133 = vpop.f32.mrb[0].mxu0
  %v134 = vadd.f32 %v34, %v133
  %v135 = vpop.f32.mrb[0].mxu0
  %136 = vmatprep.mubr.f32.mxu0 0.0
  %137 = vmatmul.mubr.f32.gmra.mrb[0].mxu0 %v50
  %v138 = vpop.f32.mrb[0].mxu0
  %v139 = vadd.f32 %v34, %v138
  %v140 = vpop.f32.mrb[0].mxu0
  %141 = vdwg.mxu0
  %v142 = vmax.f32 %v119, 0.0
  %v143 = vmax.f32 %v124, 0.0
  %v144 = vmax.f32 %v129, 0.0
  %v145 = vmax.f32 %v134, 0.0
  %v146 = vmax.f32 %v139, 0.0
  %v147 = vld [vmem:[%s3] sm:$0xff]
  %v148 = vld [vmem:[%s3 + $0x8] sm:$0xff]
  %v149 = vld [vmem:[%s3 + $0x10] sm:$0xff]
  %v150 = vld [vmem:[%s3 + $0x18] sm:$0xff]
  %v151 = vld [vmem:[%s3 + $0x20] sm:$0xff]
  %v152 = vld [vmem:[%s3 + $0x28] sm:$0xff]
  %v153 = vld [vmem:[%s3 + $0x30] sm:$0xff]
  %v154 = vld [vmem:[%s3 + $0x38] sm:$0xff]
  %v155 = vld [vmem:[%s3 + $0x40] sm:$0xff]
  %v156 = vld [vmem:[%s3 + $0x48] sm:$0xff]
  %v157 = vld [vmem:[%s3 + $0x50] sm:$0xff]
  %v158 = vld [vmem:[%s3 + $0x58] sm:$0xff]
  %v159 = vld [vmem:[%s3 + $0x60] sm:$0xff]
  %v160 = vld [vmem:[%s3 + $0x68] sm:$0xff]
  %v161 = vld [vmem:[%s3 + $0x70] sm:$0xff]
  %v162 = vld [vmem:[%s3 + $0x78] sm:$0xff]
  %v163 = vld [vmem:[%s4] sm:$0x1]
  %v165 = vlaneseq
  %v166 = vshrl.u32 %v165, 7
  %v167 = vsub.s32 0, %v166
  %v168 = vrot.slane %v163, %v167
  %170 = vmatprep.subr.mxu0 0.0
  %171 = vmatpush1.msra.mxu0 %v147
  %172 = vmatprep.subr.mxu0 0.0
  %173 = vmatpush1.msra.mxu0 %v148
  %174 = vmatprep.subr.mxu0 0.0
  %175 = vmatpush1.msra.mxu0 %v149
  %176 = vmatprep.subr.mxu0 0.0
  %177 = vmatpush1.msra.mxu0 %v150
  %178 = vmatprep.subr.mxu0 0.0
  %179 = vmatpush1.msra.mxu0 %v151
  %180 = vmatprep.subr.mxu0 0.0
  %181 = vmatpush1.msra.mxu0 %v152
  %182 = vmatprep.subr.mxu0 0.0
  %183 = vmatpush1.msra.mxu0 %v153
  %184 = vmatprep.subr.mxu0 0.0
  %185 = vmatpush1.msra.mxu0 %v154
  %186 = vmatprep.subr.mxu0 0.0
  %187 = vmatpush1.msra.mxu0 %v155
  %188 = vmatprep.subr.mxu0 0.0
  %189 = vmatpush1.msra.mxu0 %v156
  %190 = vmatprep.subr.mxu0 0.0
  %191 = vmatpush1.msra.mxu0 %v157
  %192 = vmatprep.subr.mxu0 0.0
  %193 = vmatpush1.msra.mxu0 %v158
  %194 = vmatprep.subr.mxu0 0.0
  %195 = vmatpush1.msra.mxu0 %v159
  %196 = vmatprep.subr.mxu0 0.0
  %197 = vmatpush1.msra.mxu0 %v160
  %198 = vmatprep.subr.mxu0 0.0
  %199 = vmatpush1.msra.mxu0 %v161
  %200 = vmatprep.subr.mxu0 0.0
  %201 = vmatpush1.msra.mxu0 %v162
  %202 = vmatprep.subr.mxu0 0.0
  %203 = vmatpush1.msra.mxu0 0.0
  %204 = vmatprep.subr.mxu0 0.0
  %205 = vmatpush1.msra.mxu0 0.0
  %206 = vmatprep.subr.mxu0 0.0
  %207 = vmatpush1.msra.mxu0 0.0
  %208 = vmatprep.subr.mxu0 0.0
  %209 = vmatpush1.msra.mxu0 0.0
  %210 = vmatprep.subr.mxu0 0.0
  %211 = vmatpush1.msra.mxu0 0.0
  %212 = vmatprep.subr.mxu0 0.0
  %213 = vmatpush1.msra.mxu0 0.0
  %214 = vmatprep.subr.mxu0 0.0
  %215 = vmatpush1.msra.mxu0 0.0
  %216 = vmatprep.subr.mxu0 0.0
  %217 = vmatpush1.msra.mxu0 0.0
  %218 = vmatprep.subr.mxu0 0.0
  %219 = vmatpush1.msra.mxu0 0.0
  %220 = vmatprep.subr.mxu0 0.0
  %221 = vmatpush1.msra.mxu0 0.0
  %222 = vmatprep.subr.mxu0 0.0
  %223 = vmatpush1.msra.mxu0 0.0
  %224 = vmatprep.subr.mxu0 0.0
  %225 = vmatpush1.msra.mxu0 0.0
  %226 = vmatprep.subr.mxu0 0.0
  %227 = vmatpush1.msra.mxu0 0.0
  %228 = vmatprep.subr.mxu0 0.0
  %229 = vmatpush1.msra.mxu0 0.0
  %230 = vmatprep.subr.mxu0 0.0
  %231 = vmatpush1.msra.mxu0 0.0
  %232 = vmatprep.subr.mxu0 0.0
  %233 = vmatpush1.msra.mxu0 0.0
  %234 = vmatprep.mubr.f32.mxu0 0.0
  %235 = vmatmul.mubr.f32.gmra.mrb[0].mxu0 %v142
  %v236 = vpop.f32.mrb[0].mxu0
  %v237 = vadd.f32 %v168, %v236
  %v238 = vpop.f32.mrb[0].mxu0
  %239 = vmatprep.mubr.f32.mxu0 0.0
  %240 = vmatmul.mubr.f32.gmra.mrb[0].mxu0 %v143
  %v241 = vpop.f32.mrb[0].mxu0
  %v242 = vadd.f32 %v168, %v241
  %v243 = vpop.f32.mrb[0].mxu0
  %244 = vmatprep.mubr.f32.mxu0 0.0
  %245 = vmatmul.mubr.f32.gmra.mrb[0].mxu0 %v144
  %v246 = vpop.f32.mrb[0].mxu0
  %v247 = vadd.f32 %v168, %v246
  %v248 = vpop.f32.mrb[0].mxu0
  %249 = vmatprep.mubr.f32.mxu0 0.0
  %250 = vmatmul.mubr.f32.gmra.mrb[0].mxu0 %v145
  %v251 = vpop.f32.mrb[0].mxu0
  %v252 = vadd.f32 %v168, %v251
  %v253 = vpop.f32.mrb[0].mxu0
  %254 = vmatprep.mubr.f32.mxu0 0.0
  %255 = vmatmul.mubr.f32.gmra.mrb[0].mxu0 %v146
  %v256 = vpop.f32.mrb[0].mxu0
  %v257 = vadd.f32 %v168, %v256
  %v258 = vpop.f32.mrb[0].mxu0
  %259 = vdwg.mxu0
  %260 = vst [vmem:[%s5] sm:$0xff] %v237
  %261 = vst [vmem:[%s5 + $0x8] sm:$0xff] %v242
  %262 = vst [vmem:[%s5 + $0x10] sm:$0xff] %v247
  %263 = vst [vmem:[%s5 + $0x18] sm:$0xff] %v252
  %264 = vst [vmem:[%s5 + $0x20] sm:$0xff] %v257
  // Predicated region
  $region22: #{nn_forward.1} parent=0 // pred_check
    _
  $region23: #{nn_forward.1} parent=0 // pred_check_branch
    %266 = sbr.rel (0) target = $region25
  $region24: #{nn_forward.1} parent=0 // pred_region
    _
  $region25: #{nn_forward.1} parent=0 // pred_fallthru
    _
  // Predicated region
  $region26: #{nn_forward.1} parent=0 // pred_check
    _
  $region27: #{nn_forward.1} parent=0 // pred_check_branch
    %268 = sbr.rel (0) target = $region29
  $region28: #{nn_forward.1} parent=0 // pred_region
    _
  $region29: #{nn_forward.1} parent=0 // pred_fallthru
    _

</llo_original>
